<compile_context>
chip_gen: v6e
topology: v6e:2x2x1
jax: 0.10.0
libtpu: 0.0.40
codegen_flags: <defaults>
</compile_context>

<pallas_src>
import jax
import jax.numpy as jnp
from jax.experimental import pallas as pl
from jax.experimental.pallas import tpu as pltpu


# Sobel taps (identical to the module's frozen nn.Parameter buffers):
#   kernelx = [[-1, 0, 1], [-2, 0, 2], [-1, 0, 1]]
#   kernely = [[ 1, 2, 1], [ 0, 0, 0], [-1,-2,-1]]


def _sobelxy_kernel(x_ref, o_ref):
    # Block shape: (TB, H, W)
    x = x_ref[...].astype(jnp.float32)
    tb, h, w = x.shape

    row = jax.lax.broadcasted_iota(jnp.int32, (tb, h, w), 1)
    col = jax.lax.broadcasted_iota(jnp.int32, (tb, h, w), 2)
    zero = jnp.zeros_like(x)

    # Hoisted boundary masks (shared across rolls).
    not_top = row != 0
    not_bot = row != h - 1
    not_lft = col != 0
    not_rgt = col != w - 1

    # Neighbor fetch = rotate + zero the wrapped edge (== zero padding).
    # Non-negative static shifts only (h-1 / w-1 is a rotation by -1).
    up = jnp.where(not_top, pltpu.roll(x, shift=1, axis=1), zero)      # x[i-1, j]
    dn = jnp.where(not_bot, pltpu.roll(x, shift=h - 1, axis=1), zero)  # x[i+1, j]

    s = up + 2.0 * x + dn          # vertical smooth
    e = up - dn                    # vertical difference

    s_l = jnp.where(not_lft, pltpu.roll(s, shift=1, axis=2), zero)      # s[i, j-1]
    s_r = jnp.where(not_rgt, pltpu.roll(s, shift=w - 1, axis=2), zero)  # s[i, j+1]
    e_l = jnp.where(not_lft, pltpu.roll(e, shift=1, axis=2), zero)      # e[i, j-1]
    e_r = jnp.where(not_rgt, pltpu.roll(e, shift=w - 1, axis=2), zero)  # e[i, j+1]

    # Cross-correlation with kernelx: gx[i,j] = s[i,j+1] - s[i,j-1]
    gx = s_r - s_l
    # Cross-correlation with kernely: gy[i,j] = e[i,j-1] + 2 e[i,j] + e[i,j+1]
    gy = e_l + 2.0 * e + e_r

    o_ref[...] = (jnp.abs(gx) + jnp.abs(gy)).astype(o_ref.dtype)


def sobelxy(x, *, batch_tile=None):
    """x: (N, 1, H, W) float array.  Returns (N, 1, H, W): |Sobel_x| + |Sobel_y|."""
    N, C, H, W = x.shape
    assert C == 1, "Sobelxy expects single-channel input (weight shape (1,1,3,3))"
    x3 = x.reshape(N, H, W)

    if batch_tile is None:
        # Pick the largest divisor of N keeping the f32 working tile ~<= 1 MiB
        # (input + output double buffers + intermediates stay well inside the
        # scoped VMEM limit, including on v7x's smaller VMEM).
        per_image_bytes = H * W * 4
        budget = 1 << 20
        tb = max(1, min(N, budget // max(per_image_bytes, 1)))
        while N % tb:
            tb -= 1
    else:
        tb = batch_tile
        assert N % tb == 0, "batch_tile must divide N"

    out3 = pl.pallas_call(
        _sobelxy_kernel,
        out_shape=jax.ShapeDtypeStruct((N, H, W), x.dtype),
        grid=(N // tb,),
        in_specs=[pl.BlockSpec((tb, H, W), lambda n: (n, 0, 0))],
        out_specs=pl.BlockSpec((tb, H, W), lambda n: (n, 0, 0)),
        compiler_params=pltpu.CompilerParams(
            dimension_semantics=("parallel",),
            vmem_limit_bytes=32 * 1024 * 1024,
        ),
    )(x3)
    return out3.reshape(N, 1, H, W)


def _sobelxy_ref(x):
    """Pure-JAX reference using lax.conv (matches F.conv2d semantics)."""
    kx = jnp.array([[-1., 0., 1.], [-2., 0., 2.], [-1., 0., 1.]],
                   dtype=jnp.float32).reshape(1, 1, 3, 3)
    ky = jnp.array([[1., 2., 1.], [0., 0., 0.], [-1., -2., -1.]],
                   dtype=jnp.float32).reshape(1, 1, 3, 3)
    dn = jax.lax.conv_dimension_numbers(x.shape, kx.shape,
                                        ("NCHW", "OIHW", "NCHW"))
    cx = jax.lax.conv_general_dilated(x, kx, (1, 1), ((1, 1), (1, 1)),
                                      dimension_numbers=dn)
    cy = jax.lax.conv_general_dilated(x, ky, (1, 1), ((1, 1), (1, 1)),
                                      dimension_numbers=dn)
    return jnp.abs(cx) + jnp.abs(cy)


if __name__ == "__main__":
    key = jax.random.PRNGKey(0)
    # NCHW input; F.conv2d with weight (1,1,3,3) implies C == 1.
    x = jax.random.normal(key, (2, 1, 16, 16), dtype=jnp.float32)

    out = jax.block_until_ready(sobelxy(x))
    ref = _sobelxy_ref(x)
    assert out.shape == ref.shape == (2, 1, 16, 16)
    assert jnp.allclose(out, ref, atol=1e-5, rtol=1e-5)

    # Second check: multiple grid steps (explicit batch tiling) + wider lanes.
    x2 = jax.random.normal(jax.random.PRNGKey(0), (4, 1, 32, 48),
                           dtype=jnp.float32)
    out2 = jax.block_until_ready(sobelxy(x2, batch_tile=2))
    ref2 = _sobelxy_ref(x2)
    assert jnp.allclose(out2, ref2, atol=1e-5, rtol=1e-5)

    print("KERNEL_OK")
</pallas_src>

<mosaic_0001>
module attributes {stable_mosaic.version = 11 : i64} {
  func.func @_sobelxy_kernel(%arg0: i32, %arg1: memref<2x16x16xf32, #tpu.memory_space<vmem>>, %arg2: memref<2x16x16xf32, #tpu.memory_space<vmem>>) attributes {dimension_semantics = [#tpu.dimension_semantics<parallel>], iteration_bounds = array<i64: 1>, scalar_prefetch = 0 : i64, scratch_operands = 0 : i64, tpu.core_type = #tpu.core_type<tc>, window_params = [{transform_indices = @transform_0, window_bounds = array<i64: 2, 16, 16>}, {transform_indices = @transform_1, window_bounds = array<i64: 2, 16, 16>}]} {
    %c0 = arith.constant 0 : index
    %c0_0 = arith.constant 0 : index
    %c0_1 = arith.constant 0 : index
    %0 = vector.load %arg1[%c0, %c0_0, %c0_1] : memref<2x16x16xf32, #tpu.memory_space<vmem>>, vector<2x16x16xf32>
    %1 = tpu.iota {dimensions = array<i32: 1>} : vector<2x16x16xi32>
    %2 = tpu.iota {dimensions = array<i32: 2>} : vector<2x16x16xi32>
    %cst = arith.constant 0.000000e+00 : f32
    %3 = vector.broadcast %cst : f32 to vector<2x16x16xf32>
    %c0_i32 = arith.constant 0 : i32
    %4 = vector.broadcast %c0_i32 : i32 to vector<2x16x16xi32>
    %5 = arith.cmpi ne, %1, %4 : vector<2x16x16xi32>
    %c15_i32 = arith.constant 15 : i32
    %6 = vector.broadcast %c15_i32 : i32 to vector<2x16x16xi32>
    %7 = arith.cmpi ne, %1, %6 : vector<2x16x16xi32>
    %c0_i32_2 = arith.constant 0 : i32
    %8 = vector.broadcast %c0_i32_2 : i32 to vector<2x16x16xi32>
    %9 = arith.cmpi ne, %2, %8 : vector<2x16x16xi32>
    %c15_i32_3 = arith.constant 15 : i32
    %10 = vector.broadcast %c15_i32_3 : i32 to vector<2x16x16xi32>
    %11 = arith.cmpi ne, %2, %10 : vector<2x16x16xi32>
    %c1_i32 = arith.constant 1 : i32
    %12 = tpu.dynamic_rotate %0 by %c1_i32 dim 1 : vector<2x16x16xf32>, i32 -> vector<2x16x16xf32>
    %13 = arith.select %5, %12, %3 : vector<2x16x16xi1>, vector<2x16x16xf32>
    %c15_i32_4 = arith.constant 15 : i32
    %14 = tpu.dynamic_rotate %0 by %c15_i32_4 dim 1 : vector<2x16x16xf32>, i32 -> vector<2x16x16xf32>
    %15 = arith.select %7, %14, %3 : vector<2x16x16xi1>, vector<2x16x16xf32>
    %cst_5 = arith.constant 2.000000e+00 : f32
    %16 = vector.broadcast %cst_5 : f32 to vector<2x16x16xf32>
    %17 = arith.mulf %16, %0 : vector<2x16x16xf32>
    %18 = arith.addf %13, %17 : vector<2x16x16xf32>
    %19 = arith.addf %18, %15 : vector<2x16x16xf32>
    %20 = arith.subf %13, %15 : vector<2x16x16xf32>
    %c1_i32_6 = arith.constant 1 : i32
    %21 = tpu.dynamic_rotate %19 by %c1_i32_6 dim 2 : vector<2x16x16xf32>, i32 -> vector<2x16x16xf32>
    %22 = arith.select %9, %21, %3 : vector<2x16x16xi1>, vector<2x16x16xf32>
    %c15_i32_7 = arith.constant 15 : i32
    %23 = tpu.dynamic_rotate %19 by %c15_i32_7 dim 2 : vector<2x16x16xf32>, i32 -> vector<2x16x16xf32>
    %24 = arith.select %11, %23, %3 : vector<2x16x16xi1>, vector<2x16x16xf32>
    %c1_i32_8 = arith.constant 1 : i32
    %25 = tpu.dynamic_rotate %20 by %c1_i32_8 dim 2 : vector<2x16x16xf32>, i32 -> vector<2x16x16xf32>
    %26 = arith.select %9, %25, %3 : vector<2x16x16xi1>, vector<2x16x16xf32>
    %c15_i32_9 = arith.constant 15 : i32
    %27 = tpu.dynamic_rotate %20 by %c15_i32_9 dim 2 : vector<2x16x16xf32>, i32 -> vector<2x16x16xf32>
    %28 = arith.select %11, %27, %3 : vector<2x16x16xi1>, vector<2x16x16xf32>
    %29 = arith.subf %24, %22 : vector<2x16x16xf32>
    %cst_10 = arith.constant 2.000000e+00 : f32
    %30 = vector.broadcast %cst_10 : f32 to vector<2x16x16xf32>
    %31 = arith.mulf %30, %20 : vector<2x16x16xf32>
    %32 = arith.addf %26, %31 : vector<2x16x16xf32>
    %33 = arith.addf %32, %28 : vector<2x16x16xf32>
    %34 = math.absf %29 : vector<2x16x16xf32>
    %35 = math.absf %33 : vector<2x16x16xf32>
    %36 = arith.addf %34, %35 : vector<2x16x16xf32>
    %c0_11 = arith.constant 0 : index
    %c0_12 = arith.constant 0 : index
    %c0_13 = arith.constant 0 : index
    %37 = vector.load %arg2[%c0_11, %c0_12, %c0_13] : memref<2x16x16xf32, #tpu.memory_space<vmem>>, vector<2x16x16xf32>
    tpu.vector_store %arg2[%c0_11, %c0_12, %c0_13], %36 {strides = array<i32>} : memref<2x16x16xf32, #tpu.memory_space<vmem>>, vector<2x16x16xf32>,
    return
  }
  func.func @transform_0(%arg0: i32) -> (i32, i32, i32) {
    %c0_i32 = arith.constant 0 : i32
    %c0_i32_0 = arith.constant 0 : i32
    %c0_i32_1 = arith.constant 0 : i32
    return %arg0, %c0_i32, %c0_i32_0 : i32, i32, i32
  }
  func.func @transform_1(%arg0: i32) -> (i32, i32, i32) {
    %c0_i32 = arith.constant 0 : i32
    %c0_i32_0 = arith.constant 0 : i32
    %c0_i32_1 = arith.constant 0 : i32
    return %arg0, %c0_i32, %c0_i32_0 : i32, i32, i32
  }
}

</mosaic_0001>

<llo_original>
// kernel: tpu_custom_call.1
$region0: #{tpu_custom_call.1}
  #allocation0 [shape = 'u32[]', space=smem, size = 0x4, offset = 0x4, fixed_abs, tag = 'smem constant byte address 0x4 - core index']
  #allocation1 [shape = 'u32[144,128]{1,0:T(1,128)}', space=vmem, size = 0x12000, scoped, tag = 'internal scratch']
  %s0 = inlined_call_operand.hbm [shape: f32[2,16,16], index: 0, kind: input, shape index: {}]
  %s1 = inlined_call_operand.hbm [shape: f32[2,16,16], index: 1, kind: output, shape index: {}]
  %s2 = sld [smem:[#allocation0]]
  $region18: #{tpu_custom_call.1} parent=0
    _
  %s4 = ssub.s32 1, %s2
  %s5 = scalar_select 0, %s4, %s2
  $region1: #{tpu_custom_call.1} parent=0
    #allocation2 [shape = 'u8[16384]{0}', space=vmem, size = 0x4000, scoped, tag = 'input window, operand 0, single buffered']
    #allocation3 [shape = 's32[1]{0}', space=sflag, size = 0x4, scoped, tag = 'scoped memory for tpu_custom_call.1']
    #allocation4 [shape = 's32[1]{0}', space=sflag, size = 0x4, scoped, tag = 'scoped memory for tpu_custom_call.1']
    #allocation5 [shape = 'u8[16384]{0}', space=vmem, size = 0x4000, scoped, tag = 'output window, operand 0, single buffered']
    %6 = vsyncpa [#allocation3], 0
    %7 = vsyncpa [#allocation4], 0
    // Predicated region
    $region2: #{tpu_custom_call.1} parent=1 // pred_check
      _
    $region3: #{tpu_custom_call.1} parent=1 // pred_check_branch
      %9 = sbr.rel (0) target = $region5
    $region4: #{tpu_custom_call.1} parent=1 // pred_region
      %s11 = ssub.s32 512, 512
      %12 = vsyncadd [#allocation3], %s11
      %s13 = sshll.u32 [#allocation2], 4
      %s14 = int_to_ptr.vmem [resolvable:$true] %s13
      %19 = dma.hbm_to_vmem [thread:$0]  %s0, 512, %s14, [#allocation3], 128, 128, 8
    $region5: #{tpu_custom_call.1} parent=1 // pred_fallthru
      _
    // Predicated region
    $region6: #{tpu_custom_call.1} parent=1 // pred_check
      _
    $region7: #{tpu_custom_call.1} parent=1 // pred_check_branch
      %21 = sbr.rel (0) target = $region9
    $region8: #{tpu_custom_call.1} parent=1 // pred_region
      %22 = dma.done [#allocation3], 512
    $region9: #{tpu_custom_call.1} parent=1 // pred_fallthru
      _
    %v23 = vld [vmem:[#allocation2] sm:$0xff]
    %v24 = vld [vmem:[#allocation2 + $0x8] sm:$0xff]
    %v25 = vld [vmem:[#allocation2 + $0x10] sm:$0xff]
    %v26 = vld [vmem:[#allocation2 + $0x18] sm:$0xff]
    %v27 = vlaneseq
    %v28 = vshrl.u32 %v27, 7
    %v29 = vadd.s32 %v28, 8
    %v30 = vlaneseq
    %v31 = vand.u32 %v30, 127
    %vm32 = vcmp.ne.s32.totalorder %v28, 0
    %vm33 = vcmp.ne.s32.totalorder %v29, 0
    %vm34 = vcmp.ne.s32.totalorder %v28, 15
    %vm35 = vcmp.ne.s32.totalorder %v29, 15
    %vm36 = vcmp.ne.s32.totalorder %v31, 0
    %vm37 = vcmp.ne.s32.totalorder %v31, 15
    %v38 = vrot.slane %v23, 7
    %v39 = vrot.slane %v25, 7
    %v40 = vrot.slane %v24, 7
    %v41 = vrot.slane %v26, 7
    %vm42 = vcmp.lt.s32.totalorder %v28, 1
    %v43 = vsel %vm42, %v38, %v40
    %v44 = vsel %vm42, %v39, %v41
    %v45 = vsel %vm42, %v40, %v38
    %v46 = vsel %vm42, %v41, %v39
    %v47 = vsel %vm32, %v45, 0.0
    %v48 = vsel %vm33, %v43, 0.0
    %v49 = vsel %vm32, %v46, 0.0
    %v50 = vsel %vm33, %v44, 0.0
    %v51 = vrot.slane %v23, 1
    %v52 = vrot.slane %v25, 1
    %v53 = vrot.slane %v24, 1
    %v54 = vrot.slane %v26, 1
    %vm55 = vcmp.lt.s32.totalorder %v28, 7
    %v56 = vsel %vm55, %v51, %v53
    %v57 = vsel %vm55, %v52, %v54
    %v58 = vsel %vm55, %v53, %v51
    %v59 = vsel %vm55, %v54, %v52
    %v60 = vsel %vm34, %v56, 0.0
    %v61 = vsel %vm35, %v58, 0.0
    %v62 = vsel %vm34, %v57, 0.0
    %v63 = vsel %vm35, %v59, 0.0
    %v64 = vmul.f32 %v23, 2.0
    %v65 = vmul.f32 %v24, 2.0
    %v66 = vmul.f32 %v25, 2.0
    %v67 = vmul.f32 %v26, 2.0
    %v68 = vadd.f32 %v47, %v64
    %v69 = vadd.f32 %v48, %v65
    %v70 = vadd.f32 %v49, %v66
    %v71 = vadd.f32 %v50, %v67
    %v72 = vadd.f32 %v68, %v60
    %v73 = vadd.f32 %v69, %v61
    %v74 = vadd.f32 %v70, %v62
    %v75 = vadd.f32 %v71, %v63
    %v76 = vsub.f32 %v47, %v60
    %v77 = vsub.f32 %v48, %v61
    %v78 = vsub.f32 %v49, %v62
    %v79 = vsub.f32 %v50, %v63
    %vm80 = vcmask 1047680
    %81 = vrot.lane.b32.xlu0 %v72, 16
    %v82 = vpop.permute.xlu0 %81
    %v83 = vsel %vm80, %v82, %v72
    %84 = vrot.lane.b32.xlu0 %v73, 16
    %v85 = vpop.permute.xlu0 %84
    %v86 = vsel %vm80, %v85, %v73
    %87 = vrot.lane.b32.xlu0 %v74, 16
    %v88 = vpop.permute.xlu0 %87
    %v89 = vsel %vm80, %v88, %v74
    %90 = vrot.lane.b32.xlu0 %v75, 16
    %v91 = vpop.permute.xlu0 %90
    %v92 = vsel %vm80, %v91, %v75
    %93 = vrot.lane.b32.xlu0 %v83, 16
    %v94 = vpop.permute.xlu0 %93
    %95 = vrot.lane.b32.xlu0 %v86, 16
    %v96 = vpop.permute.xlu0 %95
    %97 = vrot.lane.b32.xlu0 %v89, 16
    %v98 = vpop.permute.xlu0 %97
    %99 = vrot.lane.b32.xlu0 %v92, 16
    %v100 = vpop.permute.xlu0 %99
    %v101 = vsel %vm80, %v94, %v72
    %v102 = vsel %vm80, %v96, %v73
    %v103 = vsel %vm80, %v98, %v74
    %v104 = vsel %vm80, %v100, %v75
    %109 = vrot.lane.b32.xlu0 %v101, 113
    %v110 = vpop.permute.xlu0 %109
    %111 = vrot.lane.b32.xlu0 %v102, 113
    %v112 = vpop.permute.xlu0 %111
    %113 = vrot.lane.b32.xlu0 %v103, 113
    %v114 = vpop.permute.xlu0 %113
    %115 = vrot.lane.b32.xlu0 %v104, 113
    %v116 = vpop.permute.xlu0 %115
    %v121 = vsel %vm36, %v110, 0.0
    %v122 = vsel %vm36, %v112, 0.0
    %v123 = vsel %vm36, %v114, 0.0
    %v124 = vsel %vm36, %v116, 0.0
    %125 = vrot.lane.b32.xlu0 %v101, 127
    %v126 = vpop.permute.xlu0 %125
    %127 = vrot.lane.b32.xlu0 %v102, 127
    %v128 = vpop.permute.xlu0 %127
    %129 = vrot.lane.b32.xlu0 %v103, 127
    %v130 = vpop.permute.xlu0 %129
    %131 = vrot.lane.b32.xlu0 %v104, 127
    %v132 = vpop.permute.xlu0 %131
    %v137 = vsel %vm37, %v126, 0.0
    %v138 = vsel %vm37, %v128, 0.0
    %v139 = vsel %vm37, %v130, 0.0
    %v140 = vsel %vm37, %v132, 0.0
    %141 = vrot.lane.b32.xlu0 %v76, 16
    %v142 = vpop.permute.xlu0 %141
    %v143 = vsel %vm80, %v142, %v76
    %144 = vrot.lane.b32.xlu0 %v77, 16
    %v145 = vpop.permute.xlu0 %144
    %v146 = vsel %vm80, %v145, %v77
    %147 = vrot.lane.b32.xlu0 %v78, 16
    %v148 = vpop.permute.xlu0 %147
    %v149 = vsel %vm80, %v148, %v78
    %150 = vrot.lane.b32.xlu0 %v79, 16
    %v151 = vpop.permute.xlu0 %150
    %v152 = vsel %vm80, %v151, %v79
    %153 = vrot.lane.b32.xlu0 %v143, 16
    %v154 = vpop.permute.xlu0 %153
    %155 = vrot.lane.b32.xlu0 %v146, 16
    %v156 = vpop.permute.xlu0 %155
    %157 = vrot.lane.b32.xlu0 %v149, 16
    %v158 = vpop.permute.xlu0 %157
    %159 = vrot.lane.b32.xlu0 %v152, 16
    %v160 = vpop.permute.xlu0 %159
    %v161 = vsel %vm80, %v154, %v76
    %v162 = vsel %vm80, %v156, %v77
    %v163 = vsel %vm80, %v158, %v78
    %v164 = vsel %vm80, %v160, %v79
    %169 = vrot.lane.b32.xlu0 %v161, 113
    %v170 = vpop.permute.xlu0 %169
    %171 = vrot.lane.b32.xlu0 %v162, 113
    %v172 = vpop.permute.xlu0 %171
    %173 = vrot.lane.b32.xlu0 %v163, 113
    %v174 = vpop.permute.xlu0 %173
    %175 = vrot.lane.b32.xlu0 %v164, 113
    %v176 = vpop.permute.xlu0 %175
    %v181 = vsel %vm36, %v170, 0.0
    %v182 = vsel %vm36, %v172, 0.0
    %v183 = vsel %vm36, %v174, 0.0
    %v184 = vsel %vm36, %v176, 0.0
    %185 = vrot.lane.b32.xlu0 %v161, 127
    %v186 = vpop.permute.xlu0 %185
    %187 = vrot.lane.b32.xlu0 %v162, 127
    %v188 = vpop.permute.xlu0 %187
    %189 = vrot.lane.b32.xlu0 %v163, 127
    %v190 = vpop.permute.xlu0 %189
    %191 = vrot.lane.b32.xlu0 %v164, 127
    %v192 = vpop.permute.xlu0 %191
    %v197 = vsel %vm37, %v186, 0.0
    %v198 = vsel %vm37, %v188, 0.0
    %v199 = vsel %vm37, %v190, 0.0
    %v200 = vsel %vm37, %v192, 0.0
    %v201 = vsub.f32 %v137, %v121
    %v202 = vsub.f32 %v138, %v122
    %v203 = vsub.f32 %v139, %v123
    %v204 = vsub.f32 %v140, %v124
    %v205 = vmul.f32 %v76, 2.0
    %v206 = vmul.f32 %v77, 2.0
    %v207 = vmul.f32 %v78, 2.0
    %v208 = vmul.f32 %v79, 2.0
    %v209 = vadd.f32 %v181, %v205
    %v210 = vadd.f32 %v182, %v206
    %v211 = vadd.f32 %v183, %v207
    %v212 = vadd.f32 %v184, %v208
    %v213 = vadd.f32 %v209, %v197
    %v214 = vadd.f32 %v210, %v198
    %v215 = vadd.f32 %v211, %v199
    %v216 = vadd.f32 %v212, %v200
    %v217 = vand.u32 2147483647, %v201
    %v218 = vand.u32 2147483647, %v202
    %v219 = vand.u32 2147483647, %v203
    %v220 = vand.u32 2147483647, %v204
    %v221 = vand.u32 2147483647, %v213
    %v222 = vand.u32 2147483647, %v214
    %v223 = vand.u32 2147483647, %v215
    %v224 = vand.u32 2147483647, %v216
    %v225 = vadd.f32 %v217, %v221
    %v226 = vadd.f32 %v218, %v222
    %v227 = vadd.f32 %v219, %v223
    %v228 = vadd.f32 %v220, %v224
    %vm229 = vcmask 130048
    %230 = vst.msk [vmem:[#allocation5] sm:$0xff] %vm229, %v225
    %231 = vst.msk [vmem:[#allocation5 + $0x8] sm:$0xff] %vm229, %v226
    %232 = vst.msk [vmem:[#allocation5 + $0x10] sm:$0xff] %vm229, %v227
    %233 = vst.msk [vmem:[#allocation5 + $0x18] sm:$0xff] %vm229, %v228
    // Predicated region
    $region10: #{tpu_custom_call.1} parent=1 // pred_check
      _
    $region11: #{tpu_custom_call.1} parent=1 // pred_check_branch
      %235 = sbr.rel (0) target = $region13
    $region12: #{tpu_custom_call.1} parent=1 // pred_region
      %s237 = ssub.s32 512, 512
      %238 = vsyncadd [#allocation4], %s237
      %s239 = sshll.u32 [#allocation5], 4
      %s240 = int_to_ptr.vmem [resolvable:$true] %s239
      %245 = dma.vmem_to_hbm [thread:$0]  %s240, 512, %s1, [#allocation4], 128, 128, 8
    $region13: #{tpu_custom_call.1} parent=1 // pred_fallthru
      _
    // Predicated region
    $region14: #{tpu_custom_call.1} parent=1 // pred_check
      _
    $region15: #{tpu_custom_call.1} parent=1 // pred_check_branch
      %247 = sbr.rel (0) target = $region17
    $region16: #{tpu_custom_call.1} parent=1 // pred_region
      %248 = dma.done [#allocation4], 512
    $region17: #{tpu_custom_call.1} parent=1 // pred_fallthru
      _
    %249 = vsyncpa [#allocation3], 1
    %250 = vsyncpa [#allocation4], 1

</llo_original>
